<compile_context>
chip_gen: v7x
topology: tpu7x:2x2x1
jax: 0.10.0
libtpu: 0.0.40
codegen_flags: <defaults>
</compile_context>

<pallas_src>
import jax
import jax.numpy as jnp
from jax import lax
from jax.experimental import pallas as pl
from jax.experimental.pallas import tpu as pltpu

_LANES = 128
_SUBLANES = 8
# 8192 rows * 128 lanes * 4 B = 4 MiB per f32 input block.
_MAX_TILE_ROWS = 8192
_VMEM_LIMIT_BYTES = 40 * 1024 * 1024
# Below this many bytes per input, XLA's fused elementwise+reduce wins.
_PALLAS_MIN_BYTES = 2 * 1024 * 1024


def _round_up(x, m):
    return ((x + m - 1) // m) * m


def _make_sq_hinge_kernel(rows, tile_rows, n_tiles, tiles_per_core, num_cores):
    """Kernel closure; all sizes are trace-time constants."""
    ragged = (rows % tile_rows) != 0
    # First logical tile index that needs any masking (partial or total).
    mask_from_tile = (n_tiles - 1) if ragged else n_tiles
    total_logical_tiles = num_cores * tiles_per_core
    any_masking = mask_from_tile < total_logical_tiles

    def kernel(out_ref, lab_ref, o_ref):
        c = pl.program_id(0)           # core-split axis ("parallel")
        i = pl.program_id(1)           # reduction axis ("arbitrary")
        g = c * tiles_per_core + i     # logical tile index

        # The (8,128) output block doubles as the per-core accumulator; it is
        # resident in VMEM across the "arbitrary" axis.
        @pl.when(i == 0)
        def _():
            o_ref[...] = jnp.zeros_like(o_ref)

        # Upcast in VMEM; bf16 inputs may stay narrow in HBM.
        x = out_ref[...].astype(jnp.float32)
        y = lab_ref[...].astype(jnp.float32)
        t = jnp.maximum(1.0 - x * y, 0.0)
        sq = t * t

        def accumulate(vals):
            # (tile_rows,128) -> (tile_rows/8, 8, 128): vreg-wise VPU adds,
            # no cross-lane traffic until the wrapper's final tiny reduce.
            o_ref[...] += jnp.sum(vals.reshape(-1, _SUBLANES, _LANES), axis=0)

        if any_masking:
            # Fast path for all full tiles; masking only on the last data tile
            # and the (clamped) redundant tile of the 2-way split.
            @pl.when(g < mask_from_tile)
            def _():
                accumulate(sq)

            @pl.when(g >= mask_from_tile)
            def _():
                row_ids = g * tile_rows + lax.broadcasted_iota(
                    jnp.int32, sq.shape, 0
                )
                accumulate(jnp.where(row_ids < rows, sq, 0.0))
        else:
            accumulate(sq)

    return kernel


def squared_hinge_loss(outputs, labels, *, use_pallas=None):
    """mean(clamp(1 - outputs*labels, 0)^2) streamed through a Pallas kernel."""
    assert outputs.shape == labels.shape
    n_elem = outputs.size

    if use_pallas is None:
        use_pallas = n_elem * outputs.dtype.itemsize >= _PALLAS_MIN_BYTES
    if not use_pallas:
        d = jnp.maximum(
            1.0 - outputs.astype(jnp.float32) * labels.astype(jnp.float32), 0.0
        )
        return jnp.mean(d * d)

    out_flat = outputs.reshape(-1)
    lab_flat = labels.reshape(-1)

    # Minimal lane padding only when n % 128 != 0; value-1 pad -> 1 - 1*1 = 0
    # contributes nothing.  Ragged *rows* are masked in-kernel, never padded.
    lane_pad = (-n_elem) % _LANES
    if lane_pad:
        out_flat = jnp.pad(out_flat, (0, lane_pad), constant_values=1)
        lab_flat = jnp.pad(lab_flat, (0, lane_pad), constant_values=1)

    rows = (n_elem + lane_pad) // _LANES
    out_2d = out_flat.reshape(rows, _LANES)
    lab_2d = lab_flat.reshape(rows, _LANES)

    # Always a multiple of 8 so the (…, 8, 128) accumulator reshape is exact.
    tile_rows = min(_MAX_TILE_ROWS, _round_up(rows, _SUBLANES))
    n_tiles = pl.cdiv(rows, tile_rows)

    # Split the row range across both TensorCores on v7x (sequential, harmless
    # loop on single-TC v5e / v6e).
    num_cores = 2 if n_tiles >= 2 else 1
    tiles_per_core = pl.cdiv(n_tiles, num_cores)

    def in_index_map(c, i):
        # Clamp the (at most one) redundant logical tile of the 2-way split to
        # the last valid block; the kernel masks its contribution to zero.
        return (jnp.minimum(c * tiles_per_core + i, n_tiles - 1), 0)

    partials = pl.pallas_call(
        _make_sq_hinge_kernel(rows, tile_rows, n_tiles, tiles_per_core, num_cores),
        out_shape=jax.ShapeDtypeStruct((num_cores * _SUBLANES, _LANES), jnp.float32),
        grid_spec=pltpu.PrefetchScalarGridSpec(
            num_scalar_prefetch=0,
            grid=(num_cores, tiles_per_core),
            in_specs=[
                pl.BlockSpec((tile_rows, _LANES), in_index_map),
                pl.BlockSpec((tile_rows, _LANES), in_index_map),
            ],
            out_specs=pl.BlockSpec((_SUBLANES, _LANES), lambda c, i: (c, 0)),
        ),
        compiler_params=pltpu.CompilerParams(
            dimension_semantics=("parallel", "arbitrary"),
            vmem_limit_bytes=_VMEM_LIMIT_BYTES,
        ),
    )(out_2d, lab_2d)

    # Single tiny cross-lane reduce + mean (true element count) in the wrapper.
    return jnp.sum(partials) / jnp.float32(n_elem)


if __name__ == "__main__":
    key = jax.random.PRNGKey(0)

    def reference(o, l):
        d = jnp.maximum(1.0 - o.astype(jnp.float32) * l.astype(jnp.float32), 0.0)
        return jnp.mean(d * d)

    def make_inputs(k, shape, dtype=jnp.float32):
        ka, kb = jax.random.split(k)
        o = jax.random.normal(ka, shape, dtype=dtype)
        l = jnp.sign(jax.random.normal(kb, shape, dtype=jnp.float32))
        l = jnp.where(l == 0, 1.0, l).astype(dtype)
        return o, l

    k1, k2 = jax.random.split(key)

    # Small example consistent with the module: scores and +/-1 labels, NCHW-ish.
    outputs, labels = make_inputs(k1, (2, 4, 16, 16))
    loss = squared_hinge_loss(outputs, labels, use_pallas=True)
    jax.block_until_ready(loss)
    ref = reference(outputs, labels)
    assert jnp.allclose(loss, ref, rtol=1e-5, atol=1e-6), (loss, ref)

    # Medium case exercising lane padding, multi-tile grid, ragged last tile and
    # the 2-way TensorCore split (incl. one clamped + fully-masked redundant tile).
    outputs2, labels2 = make_inputs(k2, (2, 4, 500, 641))
    loss2 = squared_hinge_loss(outputs2, labels2, use_pallas=True)
    jax.block_until_ready(loss2)
    ref2 = reference(outputs2, labels2)
    assert jnp.allclose(loss2, ref2, rtol=1e-4, atol=1e-6), (loss2, ref2)

    print("KERNEL_OK")
</pallas_src>

<mosaic_0001>
module attributes {stable_mosaic.version = 11 : i64} {
  func.func @kernel(%arg0: i32, %arg1: i32, %arg2: memref<16x128xf32, #tpu.memory_space<vmem>>, %arg3: memref<16x128xf32, #tpu.memory_space<vmem>>, %arg4: memref<8x128xf32, #tpu.memory_space<vmem>>) attributes {dimension_semantics = [#tpu.dimension_semantics<parallel>, #tpu.dimension_semantics<arbitrary>], iteration_bounds = array<i64: 1, 1>, scalar_prefetch = 0 : i64, scratch_operands = 0 : i64, tpu.core_type = #tpu.core_type<tc>, window_params = [{transform_indices = @transform_0, window_bounds = array<i64: 16, 128>}, {transform_indices = @transform_1, window_bounds = array<i64: 16, 128>}, {transform_indices = @transform_2, window_bounds = array<i64: 8, 128>}]} {
    %c0_i32 = arith.constant 0 : i32
    %0 = arith.cmpi eq, %arg1, %c0_i32 : i32
    %1 = arith.extui %0 : i1 to i32
    %c0_i32_0 = arith.constant 0 : i32
    %2 = arith.cmpi ne, %1, %c0_i32_0 : i32
    scf.if %2 {
      %cst_10 = arith.constant 0.000000e+00 : f32
      %16 = vector.broadcast %cst_10 : f32 to vector<8x128xf32>
      %c0_11 = arith.constant 0 : index
      %c0_12 = arith.constant 0 : index
      %17 = vector.load %arg4[%c0_11, %c0_12] : memref<8x128xf32, #tpu.memory_space<vmem>>, vector<8x128xf32>
      tpu.vector_store %arg4[%c0_11, %c0_12], %16 {strides = array<i32>} : memref<8x128xf32, #tpu.memory_space<vmem>>, vector<8x128xf32>,
    } else {
    }
    %c0 = arith.constant 0 : index
    %c0_1 = arith.constant 0 : index
    %3 = vector.load %arg2[%c0, %c0_1] : memref<16x128xf32, #tpu.memory_space<vmem>>, vector<16x128xf32>
    %c0_2 = arith.constant 0 : index
    %c0_3 = arith.constant 0 : index
    %4 = vector.load %arg3[%c0_2, %c0_3] : memref<16x128xf32, #tpu.memory_space<vmem>>, vector<16x128xf32>
    %5 = arith.mulf %3, %4 : vector<16x128xf32>
    %cst = arith.constant 1.000000e+00 : f32
    %6 = vector.broadcast %cst : f32 to vector<16x128xf32>
    %7 = arith.subf %6, %5 : vector<16x128xf32>
    %cst_4 = arith.constant 0.000000e+00 : f32
    %8 = vector.broadcast %cst_4 : f32 to vector<16x128xf32>
    %9 = arith.maximumf %7, %8 : vector<16x128xf32>
    %10 = arith.mulf %9, %9 : vector<16x128xf32>
    %c0_5 = arith.constant 0 : index
    %c0_6 = arith.constant 0 : index
    %11 = vector.load %arg4[%c0_5, %c0_6] : memref<8x128xf32, #tpu.memory_space<vmem>>, vector<8x128xf32>
    %12 = vector.shape_cast %10 : vector<16x128xf32> to vector<2x8x128xf32>
    %cst_7 = arith.constant dense<0.000000e+00> : vector<8x128xf32>
    %13 = vector.multi_reduction <add>, %12, %cst_7 [0] : vector<2x8x128xf32> to vector<8x128xf32>
    %14 = arith.addf %11, %13 : vector<8x128xf32>
    %c0_8 = arith.constant 0 : index
    %c0_9 = arith.constant 0 : index
    %15 = vector.load %arg4[%c0_8, %c0_9] : memref<8x128xf32, #tpu.memory_space<vmem>>, vector<8x128xf32>
    tpu.vector_store %arg4[%c0_8, %c0_9], %14 {strides = array<i32>} : memref<8x128xf32, #tpu.memory_space<vmem>>, vector<8x128xf32>,
    return
  }
  func.func @transform_0(%arg0: i32, %arg1: i32) -> (i32, i32) {
    %c1_i32 = arith.constant 1 : i32
    %0 = arith.muli %arg0, %c1_i32 : i32
    %1 = arith.addi %0, %arg1 : i32
    %c0_i32 = arith.constant 0 : i32
    %2 = arith.minsi %1, %c0_i32 : i32
    %c0_i32_0 = arith.constant 0 : i32
    %c0_i32_1 = arith.constant 0 : i32
    return %2, %c0_i32_0 : i32, i32
  }
  func.func @transform_1(%arg0: i32, %arg1: i32) -> (i32, i32) {
    %c1_i32 = arith.constant 1 : i32
    %0 = arith.muli %arg0, %c1_i32 : i32
    %1 = arith.addi %0, %arg1 : i32
    %c0_i32 = arith.constant 0 : i32
    %2 = arith.minsi %1, %c0_i32 : i32
    %c0_i32_0 = arith.constant 0 : i32
    %c0_i32_1 = arith.constant 0 : i32
    return %2, %c0_i32_0 : i32, i32
  }
  func.func @transform_2(%arg0: i32, %arg1: i32) -> (i32, i32) {
    %c0_i32 = arith.constant 0 : i32
    %c0_i32_0 = arith.constant 0 : i32
    return %arg0, %c0_i32 : i32, i32
  }
}

</mosaic_0001>

<llo_original>
// kernel: tpu_custom_call.1
$region0: #{tpu_custom_call.1}
  #allocation0 [shape = 'u32[]', space=smem, size = 0x4, offset = 0x4, fixed_abs, tag = 'smem constant byte address 0x4 - core index']
  #allocation1 [shape = 'u32[144,128]{1,0:T(1,128)}', space=vmem, size = 0x12000, scoped, tag = 'internal scratch']
  %s0 = inlined_call_operand.hbm [shape: f32[16,128], index: 0, kind: input, shape index: {}]
  %s1 = inlined_call_operand.hbm [shape: f32[16,128], index: 1, kind: input, shape index: {}]
  %s2 = inlined_call_operand.hbm [shape: f32[8,128], index: 2, kind: output, shape index: {}]
  %s3 = sld [smem:[#allocation0]]
  $region30: #{tpu_custom_call.1} parent=0
    _
  %s5 = ssub.s32 1, %s3
  %s6 = scalar_select 0, %s5, %s3
  $region1: #{tpu_custom_call.1} parent=0
    #allocation2 [shape = 'u8[8192]{0}', space=vmem, size = 0x2000, scoped, tag = 'input window, operand 0, single buffered']
    #allocation3 [shape = 's32[1]{0}', space=sflag, size = 0x4, scoped, tag = 'scoped memory for tpu_custom_call.1']
    #allocation4 [shape = 's32[1]{0}', space=sflag, size = 0x4, scoped, tag = 'scoped memory for tpu_custom_call.1']
    #allocation5 [shape = 'u8[8192]{0}', space=vmem, size = 0x2000, scoped, tag = 'input window, operand 1, single buffered']
    #allocation6 [shape = 's32[1]{0}', space=sflag, size = 0x4, scoped, tag = 'scoped memory for tpu_custom_call.1']
    #allocation7 [shape = 'u8[4096]{0}', space=vmem, size = 0x1000, scoped, tag = 'output window, operand 0, single buffered']
    %7 = vsyncpa [#allocation3], 0
    %8 = vsyncpa [#allocation6], 0
    %9 = vsyncpa [#allocation4], 0
    // Predicated region
    $region2: #{tpu_custom_call.1} parent=1 // pred_check
      _
    $region3: #{tpu_custom_call.1} parent=1 // pred_check_branch
      %11 = sbr.rel (0) target = $region5
    $region4: #{tpu_custom_call.1} parent=1 // pred_region
      %s12 = sadd.s32 0, 0
      %p13 = scmp.lt.s32.totalorder %s12, 0
      %s14 = scalar_select %p13, %s12, 0
      %s15 = smul.u32 2, %s14
      %s17 = ssub.s32 256, 256
      %18 = vsyncadd [#allocation3], %s17
      %s19 = smul.addr %s15, 128
      %s20 = scalar_lea.hbm %s0, %s19
      %s21 = sshll.u32 [#allocation2], 4
      %s22 = int_to_ptr.vmem [resolvable:$true] %s21
      %27 = dma.hbm_to_vmem [thread:$0]  %s20, 256, %s22, [#allocation3], 128, 128, 8
    $region5: #{tpu_custom_call.1} parent=1 // pred_fallthru
      _
    // Predicated region
    $region6: #{tpu_custom_call.1} parent=1 // pred_check
      _
    $region7: #{tpu_custom_call.1} parent=1 // pred_check_branch
      %29 = sbr.rel (0) target = $region9
    $region8: #{tpu_custom_call.1} parent=1 // pred_region
      %s30 = sadd.s32 0, 0
      %p31 = scmp.lt.s32.totalorder %s30, 0
      %s32 = scalar_select %p31, %s30, 0
      %s33 = smul.u32 2, %s32
      %s35 = ssub.s32 256, 256
      %36 = vsyncadd [#allocation6], %s35
      %s37 = smul.addr %s33, 128
      %s38 = scalar_lea.hbm %s1, %s37
      %s39 = sshll.u32 [#allocation5], 4
      %s40 = int_to_ptr.vmem [resolvable:$true] %s39
      %45 = dma.hbm_to_vmem [thread:$0]  %s38, 256, %s40, [#allocation6], 128, 128, 8
    $region9: #{tpu_custom_call.1} parent=1 // pred_fallthru
      _
    // Predicated region
    $region10: #{tpu_custom_call.1} parent=1 // pred_check
      _
    $region11: #{tpu_custom_call.1} parent=1 // pred_check_branch
      %47 = sbr.rel (0) target = $region13
    $region12: #{tpu_custom_call.1} parent=1 // pred_region
      %48 = dma.done [#allocation3], 256
    $region13: #{tpu_custom_call.1} parent=1 // pred_fallthru
      _
    // Predicated region
    $region14: #{tpu_custom_call.1} parent=1 // pred_check
      _
    $region15: #{tpu_custom_call.1} parent=1 // pred_check_branch
      %50 = sbr.rel (0) target = $region17
    $region16: #{tpu_custom_call.1} parent=1 // pred_region
      %51 = dma.done [#allocation6], 256
    $region17: #{tpu_custom_call.1} parent=1 // pred_fallthru
      _
    %s52 = sadd.s32 0, 0
    %p53 = scmp.lt.s32.totalorder %s52, 0
    %s54 = scalar_select %p53, %s52, 0
    %s55 = smul.u32 2, %s54
    %s56 = sadd.s32 0, 0
    %p57 = scmp.lt.s32.totalorder %s56, 0
    %s58 = scalar_select %p57, %s56, 0
    %s59 = smul.u32 2, %s58
    %p60 = scmp.eq.s32.totalorder 0, 0
    // Predicated region
    $region18: #{tpu_custom_call.1} parent=1 // pred_check
      %p61 = pneg %p60
    $region19: #{tpu_custom_call.1} parent=1 // pred_check_branch
      %63 = sbr.rel (%p61) target = $region21
    $region20: #{tpu_custom_call.1} parent=1 // pred_region
      %64 = vst [vmem:[#allocation7] sm:$0xff] 0.0
    $region21: #{tpu_custom_call.1} parent=1 // pred_fallthru
      _
    %v65 = vld [vmem:[#allocation2] sm:$0xff]
    %v66 = vld [vmem:[#allocation2 + $0x8] sm:$0xff]
    %v67 = vld [vmem:[#allocation5] sm:$0xff]
    %v68 = vld [vmem:[#allocation5 + $0x8] sm:$0xff]
    %v69 = vmul.f32 %v65, %v67
    %v70 = vmul.f32 %v66, %v68
    %v71 = vsub.f32 1.0, %v69
    %v72 = vsub.f32 1.0, %v70
    %v73 = vmax.f32 %v71, 0.0
    %v74 = vmax.f32 %v72, 0.0
    %v75 = vmul.f32 %v73, %v73
    %v76 = vmul.f32 %v74, %v74
    %v77 = vld [vmem:[#allocation7] sm:$0xff]
    %v78 = vadd.f32 %v75, %v76
    %v79 = vadd.f32 %v77, %v78
    %80 = vst [vmem:[#allocation7] sm:$0xff] %v79
    // Predicated region
    $region22: #{tpu_custom_call.1} parent=1 // pred_check
      _
    $region23: #{tpu_custom_call.1} parent=1 // pred_check_branch
      %82 = sbr.rel (0) target = $region25
    $region24: #{tpu_custom_call.1} parent=1 // pred_region
      %s84 = ssub.s32 128, 128
      %85 = vsyncadd [#allocation4], %s84
      %s87 = sshll.u32 [#allocation7], 4
      %s88 = int_to_ptr.vmem [resolvable:$true] %s87
      %90 = dma.vmem_to_hbm [thread:$0]  %s88, 128, %s2, [#allocation4]
    $region25: #{tpu_custom_call.1} parent=1 // pred_fallthru
      _
    // Predicated region
    $region26: #{tpu_custom_call.1} parent=1 // pred_check
      _
    $region27: #{tpu_custom_call.1} parent=1 // pred_check_branch
      %92 = sbr.rel (0) target = $region29
    $region28: #{tpu_custom_call.1} parent=1 // pred_region
      %93 = dma.done [#allocation4], 128
    $region29: #{tpu_custom_call.1} parent=1 // pred_fallthru
      _
    %94 = vsyncpa [#allocation3], 1
    %95 = vsyncpa [#allocation6], 1
    %96 = vsyncpa [#allocation4], 1

</llo_original>
